<compile_context>
chip_gen: v6e
topology: v6e:2x2x1
jax: 0.10.0
libtpu: 0.0.40
codegen_flags: <defaults>
</compile_context>

<pallas_src>
import jax
import jax.numpy as jnp
from jax.experimental import pallas as pl
from jax.experimental.pallas import tpu as pltpu

LANE = 128    # vreg / MXU lane width
IN_PAD = 8    # pose feature dim (3) zero-padded to one sublane group


def _round_up(x, m):
    return ((x + m - 1) // m) * m


def _leaky_relu(v, slope=0.1):
    # max(v, slope*v) == LeakyReLU(slope) for 0 < slope < 1
    return jnp.maximum(v, slope * v)


def p_encoder_kernel(x_ref, w_ref, b_ref, o_ref):
    """Whole 4-layer MLP for one batch tile.

    x_ref: (TB, IN_PAD)            pose, zero-padded to 8 features (streamed)
    w_ref: (IN_PAD + 3*HID, HID)   packed zero-padded weight slab  (resident)
    b_ref: (4, HID)                packed zero-padded biases       (resident)
    o_ref: (TB, HID)               lane-dense output; cols >= 2*z_dim are 0
    """
    hid = w_ref.shape[1]
    h = x_ref[...]                                                  # (TB, 8)
    # layer 1: (TB, 8) @ (8, HID); zero padding keeps the unused lanes exactly 0
    h = _leaky_relu(
        jnp.dot(h, w_ref[0:IN_PAD, :], preferred_element_type=jnp.float32)
        + b_ref[0:1, :])
    # layers 2..4: (TB, HID) @ (HID, HID), static sublane-aligned slab slices
    for layer in range(3):
        r0 = IN_PAD + layer * hid
        h = _leaky_relu(
            jnp.dot(h, w_ref[r0:r0 + hid, :], preferred_element_type=jnp.float32)
            + b_ref[layer + 1:layer + 2, :])
    o_ref[...] = h


def init_p_encoder_params(key, z_dim):
    """PyTorch nn.Linear default init: U(-1/sqrt(fan_in), 1/sqrt(fan_in)).
    (init_weights() in the original module only touches Conv/BatchNorm layers.)
    Weights stored (in_features, out_features) so each layer is x @ W + b."""
    dims = [3, 32, 64, 128, 2 * z_dim]
    params = []
    for i in range(4):
        fan_in, fan_out = dims[i], dims[i + 1]
        key, kw, kb = jax.random.split(key, 3)
        bound = 1.0 / (fan_in ** 0.5)
        w = jax.random.uniform(kw, (fan_in, fan_out), jnp.float32, -bound, bound)
        b = jax.random.uniform(kb, (fan_out,), jnp.float32, -bound, bound)
        params.append((w, b))
    return params


def pack_p_encoder_params(params):
    """One-time packing (init-time, not per forward) into two VMEM-friendly slabs.

    Weight slab rows:  [0:8)                 -> W1 (3 x 32   in the top-left corner)
                       [8:8+HID)             -> W2 (32 x 64)
                       [8+HID:8+2*HID)       -> W3 (64 x 128)
                       [8+2*HID:8+3*HID)     -> W4 (128 x 2*z_dim)
    Everything outside the true weight footprint is zero, so the padded lanes of
    every intermediate activation are exactly zero and the math is unchanged.
    """
    assert len(params) == 4
    out_dim = params[-1][0].shape[1]                 # 2 * z_dim
    hid = max(LANE, _round_up(out_dim, LANE))
    w_slab = jnp.zeros((IN_PAD + 3 * hid, hid), jnp.float32)
    b_slab = jnp.zeros((4, hid), jnp.float32)
    row = 0
    for i, (w, b) in enumerate(params):
        fan_in, fan_out = w.shape
        w_slab = w_slab.at[row:row + fan_in, :fan_out].set(w)
        b_slab = b_slab.at[i, :fan_out].set(b)
        row += IN_PAD if i == 0 else hid
    return w_slab, b_slab, out_dim, hid


def p_encoder_forward(pose, packed, *, batch_tile=1024):
    """pose: (B, 3) f32  ->  (B, 2*z_dim, 1) f32, matching P_Encoder.forward."""
    w_slab, b_slab, out_dim, hid = packed
    B = pose.shape[0]
    TB = min(batch_tile, _round_up(B, 8))
    B_pad = _round_up(B, TB)

    # Zero-pad rows to a whole number of tiles and features 3 -> 8
    # (the zero columns multiply zero weight rows, so x @ W1 is unchanged).
    x = jnp.zeros((B_pad, IN_PAD), jnp.float32).at[:B, :3].set(pose)

    flops = 2 * B_pad * (3 * 32 + 32 * 64 + 64 * 128 + 128 * out_dim)
    bytes_accessed = 4 * (x.size + w_slab.size + b_slab.size + B_pad * hid)

    out = pl.pallas_call(
        p_encoder_kernel,
        out_shape=jax.ShapeDtypeStruct((B_pad, hid), jnp.float32),
        grid_spec=pltpu.PrefetchScalarGridSpec(
            num_scalar_prefetch=0,
            grid=(B_pad // TB,),
            in_specs=[
                pl.BlockSpec((TB, IN_PAD), lambda i: (i, 0)),      # streamed pose tile
                pl.BlockSpec(w_slab.shape, lambda i: (0, 0)),      # VMEM-resident weights
                pl.BlockSpec(b_slab.shape, lambda i: (0, 0)),      # VMEM-resident biases
            ],
            out_specs=pl.BlockSpec((TB, hid), lambda i: (i, 0)),
        ),
        compiler_params=pltpu.CompilerParams(
            dimension_semantics=("parallel",)),
        cost_estimate=pl.CostEstimate(
            flops=flops, transcendentals=0, bytes_accessed=bytes_accessed),
    )(x, w_slab, b_slab)

    # strip batch/lane padding and apply the module's unsqueeze(2)
    return out[:B, :out_dim, None]


def p_encoder_reference(pose, params):
    h = pose
    for (w, b) in params:
        v = h @ w + b
        h = jnp.maximum(v, 0.1 * v)
    return h[:, :, None]


if __name__ == "__main__":
    key = jax.random.PRNGKey(0)
    z_dim = 32
    B = 8

    kparam, kin = jax.random.split(key)
    params = init_p_encoder_params(kparam, z_dim)
    packed = pack_p_encoder_params(params)   # one-time packing / padding
    pose = jax.random.normal(kin, (B, 3), jnp.float32)

    out = jax.block_until_ready(p_encoder_forward(pose, packed))
    ref = p_encoder_reference(pose, params)

    assert out.shape == (B, 2 * z_dim, 1), out.shape
    assert jnp.allclose(out, ref, atol=1e-5, rtol=1e-5), "mismatch vs reference"

    print("KERNEL_OK")
</pallas_src>

<mosaic_0001>
module attributes {stable_mosaic.version = 11 : i64} {
  func.func @p_encoder_kernel(%arg0: i32, %arg1: memref<8x8xf32, #tpu.memory_space<vmem>>, %arg2: memref<392x128xf32, #tpu.memory_space<vmem>>, %arg3: memref<4x128xf32, #tpu.memory_space<vmem>>, %arg4: memref<8x128xf32, #tpu.memory_space<vmem>>) attributes {dimension_semantics = [#tpu.dimension_semantics<parallel>], iteration_bounds = array<i64: 1>, scalar_prefetch = 0 : i64, scratch_operands = 0 : i64, tpu.core_type = #tpu.core_type<tc>, window_params = [{transform_indices = @transform_0, window_bounds = array<i64: 8, 8>}, {pipeline_mode = #tpu.pipeline_mode<synchronous>, transform_indices = @transform_1, window_bounds = array<i64: 392, 128>}, {pipeline_mode = #tpu.pipeline_mode<synchronous>, transform_indices = @transform_2, window_bounds = array<i64: 4, 128>}, {transform_indices = @transform_3, window_bounds = array<i64: 8, 128>}]} {
    %c0 = arith.constant 0 : index
    %c0_0 = arith.constant 0 : index
    %0 = vector.load %arg1[%c0, %c0_0] : memref<8x8xf32, #tpu.memory_space<vmem>>, vector<8x8xf32>
    %c0_1 = arith.constant 0 : index
    %c0_2 = arith.constant 0 : index
    %1 = vector.load %arg2[%c0_1, %c0_2] : memref<392x128xf32, #tpu.memory_space<vmem>>, vector<8x128xf32>
    %cst = arith.constant dense<0.000000e+00> : vector<8x128xf32>
    %2 = tpu.matmul %0, %1, %cst {dimension_numbers = #tpu.dot_dimension_numbers<[1], [0], [0], [1], [0, 0, 1, 1], [], []>} : vector<8x8xf32>, vector<8x128xf32>, vector<8x128xf32> -> vector<8x128xf32>
    %c0_3 = arith.constant 0 : index
    %c0_4 = arith.constant 0 : index
    %3 = vector.load %arg3[%c0_3, %c0_4] : memref<4x128xf32, #tpu.memory_space<vmem>>, vector<1x128xf32>
    %4 = vector.broadcast %3 : vector<1x128xf32> to vector<8x128xf32>
    %5 = arith.addf %2, %4 : vector<8x128xf32>
    %cst_5 = arith.constant 1.000000e-01 : f32
    %6 = vector.broadcast %cst_5 : f32 to vector<8x128xf32>
    %7 = arith.mulf %6, %5 : vector<8x128xf32>
    %8 = arith.maximumf %5, %7 : vector<8x128xf32>
    %c8 = arith.constant 8 : index
    %c0_6 = arith.constant 0 : index
    %9 = vector.load %arg2[%c8, %c0_6] : memref<392x128xf32, #tpu.memory_space<vmem>>, vector<128x128xf32>
    %cst_7 = arith.constant dense<0.000000e+00> : vector<8x128xf32>
    %10 = tpu.matmul %8, %9, %cst_7 {dimension_numbers = #tpu.dot_dimension_numbers<[1], [0], [0], [1], [0, 0, 1, 1], [], []>} : vector<8x128xf32>, vector<128x128xf32>, vector<8x128xf32> -> vector<8x128xf32>
    %c1 = arith.constant 1 : index
    %c0_8 = arith.constant 0 : index
    %11 = vector.load %arg3[%c1, %c0_8] : memref<4x128xf32, #tpu.memory_space<vmem>>, vector<1x128xf32>
    %12 = vector.broadcast %11 : vector<1x128xf32> to vector<8x128xf32>
    %13 = arith.addf %10, %12 : vector<8x128xf32>
    %cst_9 = arith.constant 1.000000e-01 : f32
    %14 = vector.broadcast %cst_9 : f32 to vector<8x128xf32>
    %15 = arith.mulf %14, %13 : vector<8x128xf32>
    %16 = arith.maximumf %13, %15 : vector<8x128xf32>
    %c136 = arith.constant 136 : index
    %c0_10 = arith.constant 0 : index
    %17 = vector.load %arg2[%c136, %c0_10] : memref<392x128xf32, #tpu.memory_space<vmem>>, vector<128x128xf32>
    %cst_11 = arith.constant dense<0.000000e+00> : vector<8x128xf32>
    %18 = tpu.matmul %16, %17, %cst_11 {dimension_numbers = #tpu.dot_dimension_numbers<[1], [0], [0], [1], [0, 0, 1, 1], [], []>} : vector<8x128xf32>, vector<128x128xf32>, vector<8x128xf32> -> vector<8x128xf32>
    %c2 = arith.constant 2 : index
    %c0_12 = arith.constant 0 : index
    %19 = vector.load %arg3[%c2, %c0_12] : memref<4x128xf32, #tpu.memory_space<vmem>>, vector<1x128xf32>
    %20 = vector.broadcast %19 : vector<1x128xf32> to vector<8x128xf32>
    %21 = arith.addf %18, %20 : vector<8x128xf32>
    %cst_13 = arith.constant 1.000000e-01 : f32
    %22 = vector.broadcast %cst_13 : f32 to vector<8x128xf32>
    %23 = arith.mulf %22, %21 : vector<8x128xf32>
    %24 = arith.maximumf %21, %23 : vector<8x128xf32>
    %c264 = arith.constant 264 : index
    %c0_14 = arith.constant 0 : index
    %25 = vector.load %arg2[%c264, %c0_14] : memref<392x128xf32, #tpu.memory_space<vmem>>, vector<128x128xf32>
    %cst_15 = arith.constant dense<0.000000e+00> : vector<8x128xf32>
    %26 = tpu.matmul %24, %25, %cst_15 {dimension_numbers = #tpu.dot_dimension_numbers<[1], [0], [0], [1], [0, 0, 1, 1], [], []>} : vector<8x128xf32>, vector<128x128xf32>, vector<8x128xf32> -> vector<8x128xf32>
    %c3 = arith.constant 3 : index
    %c0_16 = arith.constant 0 : index
    %27 = vector.load %arg3[%c3, %c0_16] : memref<4x128xf32, #tpu.memory_space<vmem>>, vector<1x128xf32>
    %28 = vector.broadcast %27 : vector<1x128xf32> to vector<8x128xf32>
    %29 = arith.addf %26, %28 : vector<8x128xf32>
    %cst_17 = arith.constant 1.000000e-01 : f32
    %30 = vector.broadcast %cst_17 : f32 to vector<8x128xf32>
    %31 = arith.mulf %30, %29 : vector<8x128xf32>
    %32 = arith.maximumf %29, %31 : vector<8x128xf32>
    %c0_18 = arith.constant 0 : index
    %c0_19 = arith.constant 0 : index
    %33 = vector.load %arg4[%c0_18, %c0_19] : memref<8x128xf32, #tpu.memory_space<vmem>>, vector<8x128xf32>
    tpu.vector_store %arg4[%c0_18, %c0_19], %32 {strides = array<i32>} : memref<8x128xf32, #tpu.memory_space<vmem>>, vector<8x128xf32>,
    return
  }
  func.func @transform_0(%arg0: i32) -> (i32, i32) {
    %c0_i32 = arith.constant 0 : i32
    %c0_i32_0 = arith.constant 0 : i32
    return %arg0, %c0_i32 : i32, i32
  }
  func.func @transform_1(%arg0: i32) -> (i32, i32) {
    %c0_i32 = arith.constant 0 : i32
    %c0_i32_0 = arith.constant 0 : i32
    %c0_i32_1 = arith.constant 0 : i32
    return %c0_i32, %c0_i32_0 : i32, i32
  }
  func.func @transform_2(%arg0: i32) -> (i32, i32) {
    %c0_i32 = arith.constant 0 : i32
    %c0_i32_0 = arith.constant 0 : i32
    %c0_i32_1 = arith.constant 0 : i32
    return %c0_i32, %c0_i32_0 : i32, i32
  }
  func.func @transform_3(%arg0: i32) -> (i32, i32) {
    %c0_i32 = arith.constant 0 : i32
    %c0_i32_0 = arith.constant 0 : i32
    return %arg0, %c0_i32 : i32, i32
  }
}

</mosaic_0001>

<llo_original>
// kernel: tpu_custom_call.1
$region0: #{tpu_custom_call.1}
  #allocation0 [shape = 'u32[]', space=smem, size = 0x4, offset = 0x4, fixed_abs, tag = 'smem constant byte address 0x4 - core index']
  #allocation1 [shape = 'u32[144,128]{1,0:T(1,128)}', space=vmem, size = 0x12000, scoped, tag = 'internal scratch']
  %s0 = inlined_call_operand.hbm [shape: f32[8,8], index: 0, kind: input, shape index: {}]
  %s1 = inlined_call_operand.hbm [shape: f32[392,128], index: 1, kind: input, shape index: {}]
  %s2 = inlined_call_operand.hbm [shape: f32[4,128], index: 2, kind: input, shape index: {}]
  %s3 = inlined_call_operand.hbm [shape: f32[8,128], index: 3, kind: output, shape index: {}]
  %s4 = sld [smem:[#allocation0]]
  $region34: #{tpu_custom_call.1} parent=0
    _
  %s6 = ssub.s32 1, %s4
  %s7 = scalar_select 0, %s6, %s4
  $region1: #{tpu_custom_call.1} parent=0
    #allocation2 [shape = 'u8[4096]{0}', space=vmem, size = 0x1000, scoped, tag = 'input window, operand 0, single buffered']
    #allocation3 [shape = 's32[1]{0}', space=sflag, size = 0x4, scoped, tag = 'scoped memory for tpu_custom_call.1']
    #allocation4 [shape = 's32[1]{0}', space=sflag, size = 0x4, scoped, tag = 'scoped memory for tpu_custom_call.1']
    #allocation5 [shape = 'u8[200704]{0}', space=vmem, size = 0x31000, scoped, tag = 'input window, operand 1, single buffered']
    #allocation6 [shape = 's32[1]{0}', space=sflag, size = 0x4, scoped, tag = 'scoped memory for tpu_custom_call.1']
    #allocation7 [shape = 'u8[2048]{0}', space=vmem, size = 0x800, scoped, tag = 'input window, operand 2, single buffered']
    #allocation8 [shape = 'u8[4096]{0}', space=vmem, size = 0x1000, scoped, tag = 'output window, operand 0, single buffered']
    %8 = vsyncpa [#allocation3], 0
    %9 = vsyncpa [#allocation6], 0
    %10 = vsyncpa [#allocation4], 0
    // Predicated region
    $region2: #{tpu_custom_call.1} parent=1 // pred_check
      _
    $region3: #{tpu_custom_call.1} parent=1 // pred_check_branch
      %12 = sbr.rel (0) target = $region5
    $region4: #{tpu_custom_call.1} parent=1 // pred_region
      %s14 = ssub.s32 128, 128
      %15 = vsyncadd [#allocation3], %s14
      %s17 = sshll.u32 [#allocation2], 4
      %s18 = int_to_ptr.vmem [resolvable:$true] %s17
      %20 = dma.hbm_to_vmem [thread:$0]  %s0, 128, %s18, [#allocation3]
    $region5: #{tpu_custom_call.1} parent=1 // pred_fallthru
      _
    // Predicated region
    $region6: #{tpu_custom_call.1} parent=1 // pred_check
      _
    $region7: #{tpu_custom_call.1} parent=1 // pred_check_branch
      %22 = sbr.rel (0) target = $region9
    $region8: #{tpu_custom_call.1} parent=1 // pred_region
      %s24 = ssub.s32 6272, 6272
      %25 = vsyncadd [#allocation6], %s24
      %s26 = sshll.u32 [#allocation5], 4
      %s27 = int_to_ptr.vmem [resolvable:$true] %s26
      %32 = dma.hbm_to_vmem [thread:$0]  %s1, 6272, %s27, [#allocation6], 128, 128, 8
    $region9: #{tpu_custom_call.1} parent=1 // pred_fallthru
      _
    // Predicated region
    $region10: #{tpu_custom_call.1} parent=1 // pred_check
      _
    $region11: #{tpu_custom_call.1} parent=1 // pred_check_branch
      %34 = sbr.rel (0) target = $region13
    $region12: #{tpu_custom_call.1} parent=1 // pred_region
      %s36 = ssub.s32 64, 64
      %37 = vsyncadd [#allocation6], %s36
      %s39 = sshll.u32 [#allocation7], 4
      %s40 = int_to_ptr.vmem [resolvable:$true] %s39
      %42 = dma.hbm_to_vmem [thread:$0]  %s2, 64, %s40, [#allocation6]
    $region13: #{tpu_custom_call.1} parent=1 // pred_fallthru
      _
    // Predicated region
    $region14: #{tpu_custom_call.1} parent=1 // pred_check
      _
    $region15: #{tpu_custom_call.1} parent=1 // pred_check_branch
      %44 = sbr.rel (0) target = $region17
    $region16: #{tpu_custom_call.1} parent=1 // pred_region
      %45 = dma.done [#allocation3], 128
    $region17: #{tpu_custom_call.1} parent=1 // pred_fallthru
      _
    // Predicated region
    $region18: #{tpu_custom_call.1} parent=1 // pred_check
      _
    $region19: #{tpu_custom_call.1} parent=1 // pred_check_branch
      %47 = sbr.rel (0) target = $region21
    $region20: #{tpu_custom_call.1} parent=1 // pred_region
      %48 = dma.done [#allocation6], 6272
    $region21: #{tpu_custom_call.1} parent=1 // pred_fallthru
      _
    // Predicated region
    $region22: #{tpu_custom_call.1} parent=1 // pred_check
      _
    $region23: #{tpu_custom_call.1} parent=1 // pred_check_branch
      %50 = sbr.rel (0) target = $region25
    $region24: #{tpu_custom_call.1} parent=1 // pred_region
      %51 = dma.done [#allocation6], 64
    $region25: #{tpu_custom_call.1} parent=1 // pred_fallthru
      _
    %v52 = vld [vmem:[#allocation2] sm:$0xff]
    %v53 = vld [vmem:[#allocation5] sm:$0xff]
    %v54 = vld [vmem:[#allocation7] sm:$0x1]
    %v55 = vlaneseq
    %v56 = vshrl.u32 %v55, 7
    %v57 = vsub.s32 0, %v56
    %v58 = vrot.slane %v54, %v57
    %vm59 = vcmask 64512
    %v61 = vsel %vm59, %v52, 0
    %63 = vmatprep.subr.mxu0 0.0
    %64 = vmatpush1.msra.mxu0 0.0
    %65 = vmatprep.subr.mxu0 0.0
    %66 = vmatpush1.msra.mxu0 0.0
    %67 = vmatprep.subr.mxu0 0.0
    %68 = vmatpush1.msra.mxu0 0.0
    %69 = vmatprep.subr.mxu0 0.0
    %70 = vmatpush1.msra.mxu0 0.0
    %71 = vmatprep.subr.mxu0 0.0
    %72 = vmatpush1.msra.mxu0 0.0
    %73 = vmatprep.subr.mxu0 0.0
    %74 = vmatpush1.msra.mxu0 0.0
    %75 = vmatprep.subr.mxu0 0.0
    %76 = vmatpush1.msra.mxu0 0.0
    %77 = vmatprep.subr.mxu0 0.0
    %78 = vmatpush1.msra.mxu0 0.0
    %79 = vmatprep.subr.mxu0 0.0
    %80 = vmatpush1.msra.mxu0 0.0
    %81 = vmatprep.subr.mxu0 0.0
    %82 = vmatpush1.msra.mxu0 0.0
    %83 = vmatprep.subr.mxu0 0.0
    %84 = vmatpush1.msra.mxu0 0.0
    %85 = vmatprep.subr.mxu0 0.0
    %86 = vmatpush1.msra.mxu0 0.0
    %87 = vmatprep.subr.mxu0 0.0
    %88 = vmatpush1.msra.mxu0 0.0
    %89 = vmatprep.subr.mxu0 0.0
    %90 = vmatpush1.msra.mxu0 0.0
    %91 = vmatprep.subr.mxu0 0.0
    %92 = vmatpush1.msra.mxu0 0.0
    %93 = vmatprep.subr.mxu0 0.0
    %94 = vmatpush1.msra.mxu0 %v53
    %95 = vmatprep.subr.mxu0 0.0
    %96 = vmatpush2.msra.mxu0 0.0
    %97 = vmatprep.subr.mxu0 0.0
    %98 = vmatpush2.msra.mxu0 0.0
    %99 = vmatprep.subr.mxu0 0.0
    %100 = vmatpush2.msra.mxu0 0.0
    %101 = vmatprep.subr.mxu0 0.0
    %102 = vmatpush2.msra.mxu0 0.0
    %103 = vmatprep.subr.mxu0 0.0
    %104 = vmatpush2.msra.mxu0 0.0
    %105 = vmatprep.subr.mxu0 0.0
    %106 = vmatpush2.msra.mxu0 0.0
    %107 = vmatprep.subr.mxu0 0.0
    %108 = vmatpush2.msra.mxu0 0.0
    %109 = vmatprep.subr.mxu0 0.0
    %110 = vmatpush2.msra.mxu0 0.0
    %111 = vmatprep.subr.mxu0 0.0
    %112 = vmatpush2.msra.mxu0 0.0
    %113 = vmatprep.subr.mxu0 0.0
    %114 = vmatpush2.msra.mxu0 0.0
    %115 = vmatprep.subr.mxu0 0.0
    %116 = vmatpush2.msra.mxu0 0.0
    %117 = vmatprep.subr.mxu0 0.0
    %118 = vmatpush2.msra.mxu0 0.0
    %119 = vmatprep.subr.mxu0 0.0
    %120 = vmatpush2.msra.mxu0 0.0
    %121 = vmatprep.subr.mxu0 0.0
    %122 = vmatpush2.msra.mxu0 0.0
    %123 = vmatprep.subr.mxu0 0.0
    %124 = vmatpush2.msra.mxu0 0.0
    %125 = vmatprep.subr.mxu0 0.0
    %126 = vmatpush2.msra.mxu0 0.0
    %127 = vmatprep.mubr.f32.mxu0 0.0
    %128 = vmatmul.mubr.f32.gmra.mxu0 %v61
    %v129 = vpop.f32.mrf.mxu0
    %v130 = vadd.f32 %v58, %v129
    %v131 = vpop.f32.mrf.mxu0
    %132 = vdwg.mxu0
    %v133 = vmul.f32 %v130, 0.1
    %v134 = vmax.f32 %v130, %v133
    %v135 = vld [vmem:[#allocation5 + $0x8] sm:$0xff]
    %v136 = vld [vmem:[#allocation5 + $0x10] sm:$0xff]
    %v137 = vld [vmem:[#allocation5 + $0x18] sm:$0xff]
    %v138 = vld [vmem:[#allocation5 + $0x20] sm:$0xff]
    %v139 = vld [vmem:[#allocation5 + $0x28] sm:$0xff]
    %v140 = vld [vmem:[#allocation5 + $0x30] sm:$0xff]
    %v141 = vld [vmem:[#allocation5 + $0x38] sm:$0xff]
    %v142 = vld [vmem:[#allocation5 + $0x40] sm:$0xff]
    %v143 = vld [vmem:[#allocation5 + $0x48] sm:$0xff]
    %v144 = vld [vmem:[#allocation5 + $0x50] sm:$0xff]
    %v145 = vld [vmem:[#allocation5 + $0x58] sm:$0xff]
    %v146 = vld [vmem:[#allocation5 + $0x60] sm:$0xff]
    %v147 = vld [vmem:[#allocation5 + $0x68] sm:$0xff]
    %v148 = vld [vmem:[#allocation5 + $0x70] sm:$0xff]
    %v149 = vld [vmem:[#allocation5 + $0x78] sm:$0xff]
    %v150 = vld [vmem:[#allocation5 + $0x80] sm:$0xff]
    %v151 = vld [vmem:[#allocation7 + $0x1] sm:$0x1]
    %v152 = vlaneseq
    %v153 = vshrl.u32 %v152, 7
    %v154 = vsub.s32 0, %v153
    %v155 = vrot.slane %v151, %v154
    %156 = vmatprep.subr.mxu0 0.0
    %157 = vmatpush1.msra.mxu0 %v150
    %158 = vmatprep.subr.mxu0 0.0
    %159 = vmatpush1.msra.mxu0 %v149
    %160 = vmatprep.subr.mxu0 0.0
    %161 = vmatpush1.msra.mxu0 %v148
    %162 = vmatprep.subr.mxu0 0.0
    %163 = vmatpush1.msra.mxu0 %v147
    %164 = vmatprep.subr.mxu0 0.0
    %165 = vmatpush1.msra.mxu0 %v146
    %166 = vmatprep.subr.mxu0 0.0
    %167 = vmatpush1.msra.mxu0 %v145
    %168 = vmatprep.subr.mxu0 0.0
    %169 = vmatpush1.msra.mxu0 %v144
    %170 = vmatprep.subr.mxu0 0.0
    %171 = vmatpush1.msra.mxu0 %v143
    %172 = vmatprep.subr.mxu0 0.0
    %173 = vmatpush1.msra.mxu0 %v142
    %174 = vmatprep.subr.mxu0 0.0
    %175 = vmatpush1.msra.mxu0 %v141
    %176 = vmatprep.subr.mxu0 0.0
    %177 = vmatpush1.msra.mxu0 %v140
    %178 = vmatprep.subr.mxu0 0.0
    %179 = vmatpush1.msra.mxu0 %v139
    %180 = vmatprep.subr.mxu0 0.0
    %181 = vmatpush1.msra.mxu0 %v138
    %182 = vmatprep.subr.mxu0 0.0
    %183 = vmatpush1.msra.mxu0 %v137
    %184 = vmatprep.subr.mxu0 0.0
    %185 = vmatpush1.msra.mxu0 %v136
    %186 = vmatprep.subr.mxu0 0.0
    %187 = vmatpush1.msra.mxu0 %v135
    %188 = vmatprep.subr.mxu0 0.0
    %189 = vmatpush2.msra.mxu0 0.0
    %190 = vmatprep.subr.mxu0 0.0
    %191 = vmatpush2.msra.mxu0 0.0
    %192 = vmatprep.subr.mxu0 0.0
    %193 = vmatpush2.msra.mxu0 0.0
    %194 = vmatprep.subr.mxu0 0.0
    %195 = vmatpush2.msra.mxu0 0.0
    %196 = vmatprep.subr.mxu0 0.0
    %197 = vmatpush2.msra.mxu0 0.0
    %198 = vmatprep.subr.mxu0 0.0
    %199 = vmatpush2.msra.mxu0 0.0
    %200 = vmatprep.subr.mxu0 0.0
    %201 = vmatpush2.msra.mxu0 0.0
    %202 = vmatprep.subr.mxu0 0.0
    %203 = vmatpush2.msra.mxu0 0.0
    %204 = vmatprep.subr.mxu0 0.0
    %205 = vmatpush2.msra.mxu0 0.0
    %206 = vmatprep.subr.mxu0 0.0
    %207 = vmatpush2.msra.mxu0 0.0
    %208 = vmatprep.subr.mxu0 0.0
    %209 = vmatpush2.msra.mxu0 0.0
    %210 = vmatprep.subr.mxu0 0.0
    %211 = vmatpush2.msra.mxu0 0.0
    %212 = vmatprep.subr.mxu0 0.0
    %213 = vmatpush2.msra.mxu0 0.0
    %214 = vmatprep.subr.mxu0 0.0
    %215 = vmatpush2.msra.mxu0 0.0
    %216 = vmatprep.subr.mxu0 0.0
    %217 = vmatpush2.msra.mxu0 0.0
    %218 = vmatprep.subr.mxu0 0.0
    %219 = vmatpush2.msra.mxu0 0.0
    %220 = vmatprep.mubr.f32.mxu0 0.0
    %221 = vmatmul.mubr.f32.gmra.mxu0 %v134
    %v222 = vpop.f32.mrf.mxu0
    %v223 = vadd.f32 %v155, %v222
    %v224 = vpop.f32.mrf.mxu0
    %225 = vdwg.mxu0
    %v226 = vmul.f32 %v223, 0.1
    %v227 = vmax.f32 %v223, %v226
    %v228 = vld [vmem:[#allocation5 + $0x88] sm:$0xff]
    %v229 = vld [vmem:[#allocation5 + $0x90] sm:$0xff]
    %v230 = vld [vmem:[#allocation5 + $0x98] sm:$0xff]
    %v231 = vld [vmem:[#allocation5 + $0xa0] sm:$0xff]
    %v232 = vld [vmem:[#allocation5 + $0xa8] sm:$0xff]
    %v233 = vld [vmem:[#allocation5 + $0xb0] sm:$0xff]
    %v234 = vld [vmem:[#allocation5 + $0xb8] sm:$0xff]
    %v235 = vld [vmem:[#allocation5 + $0xc0] sm:$0xff]
    %v236 = vld [vmem:[#allocation5 + $0xc8] sm:$0xff]
    %v237 = vld [vmem:[#allocation5 + $0xd0] sm:$0xff]
    %v238 = vld [vmem:[#allocation5 + $0xd8] sm:$0xff]
    %v239 = vld [vmem:[#allocation5 + $0xe0] sm:$0xff]
    %v240 = vld [vmem:[#allocation5 + $0xe8] sm:$0xff]
    %v241 = vld [vmem:[#allocation5 + $0xf0] sm:$0xff]
    %v242 = vld [vmem:[#allocation5 + $0xf8] sm:$0xff]
    %v243 = vld [vmem:[#allocation5 + $0x100] sm:$0xff]
    %v244 = vld [vmem:[#allocation7 + $0x2] sm:$0x1]
    %v245 = vlaneseq
    %v246 = vshrl.u32 %v245, 7
    %v247 = vsub.s32 0, %v246
    %v248 = vrot.slane %v244, %v247
    %249 = vmatprep.subr.mxu0 0.0
    %250 = vmatpush1.msra.mxu0 %v243
    %251 = vmatprep.subr.mxu0 0.0
    %252 = vmatpush1.msra.mxu0 %v242
    %253 = vmatprep.subr.mxu0 0.0
    %254 = vmatpush1.msra.mxu0 %v241
    %255 = vmatprep.subr.mxu0 0.0
    %256 = vmatpush1.msra.mxu0 %v240
    %257 = vmatprep.subr.mxu0 0.0
    %258 = vmatpush1.msra.mxu0 %v239
    %259 = vmatprep.subr.mxu0 0.0
    %260 = vmatpush1.msra.mxu0 %v238
    %261 = vmatprep.subr.mxu0 0.0
    %262 = vmatpush1.msra.mxu0 %v237
    %263 = vmatprep.subr.mxu0 0.0
    %264 = vmatpush1.msra.mxu0 %v236
    %265 = vmatprep.subr.mxu0 0.0
    %266 = vmatpush1.msra.mxu0 %v235
    %267 = vmatprep.subr.mxu0 0.0
    %268 = vmatpush1.msra.mxu0 %v234
    %269 = vmatprep.subr.mxu0 0.0
    %270 = vmatpush1.msra.mxu0 %v233
    %271 = vmatprep.subr.mxu0 0.0
    %272 = vmatpush1.msra.mxu0 %v232
    %273 = vmatprep.subr.mxu0 0.0
    %274 = vmatpush1.msra.mxu0 %v231
    %275 = vmatprep.subr.mxu0 0.0
    %276 = vmatpush1.msra.mxu0 %v230
    %277 = vmatprep.subr.mxu0 0.0
    %278 = vmatpush1.msra.mxu0 %v229
    %279 = vmatprep.subr.mxu0 0.0
    %280 = vmatpush1.msra.mxu0 %v228
    %281 = vmatprep.subr.mxu0 0.0
    %282 = vmatpush2.msra.mxu0 0.0
    %283 = vmatprep.subr.mxu0 0.0
    %284 = vmatpush2.msra.mxu0 0.0
    %285 = vmatprep.subr.mxu0 0.0
    %286 = vmatpush2.msra.mxu0 0.0
    %287 = vmatprep.subr.mxu0 0.0
    %288 = vmatpush2.msra.mxu0 0.0
    %289 = vmatprep.subr.mxu0 0.0
    %290 = vmatpush2.msra.mxu0 0.0
    %291 = vmatprep.subr.mxu0 0.0
    %292 = vmatpush2.msra.mxu0 0.0
    %293 = vmatprep.subr.mxu0 0.0
    %294 = vmatpush2.msra.mxu0 0.0
    %295 = vmatprep.subr.mxu0 0.0
    %296 = vmatpush2.msra.mxu0 0.0
    %297 = vmatprep.subr.mxu0 0.0
    %298 = vmatpush2.msra.mxu0 0.0
    %299 = vmatprep.subr.mxu0 0.0
    %300 = vmatpush2.msra.mxu0 0.0
    %301 = vmatprep.subr.mxu0 0.0
    %302 = vmatpush2.msra.mxu0 0.0
    %303 = vmatprep.subr.mxu0 0.0
    %304 = vmatpush2.msra.mxu0 0.0
    %305 = vmatprep.subr.mxu0 0.0
    %306 = vmatpush2.msra.mxu0 0.0
    %307 = vmatprep.subr.mxu0 0.0
    %308 = vmatpush2.msra.mxu0 0.0
    %309 = vmatprep.subr.mxu0 0.0
    %310 = vmatpush2.msra.mxu0 0.0
    %311 = vmatprep.subr.mxu0 0.0
    %312 = vmatpush2.msra.mxu0 0.0
    %313 = vmatprep.mubr.f32.mxu0 0.0
    %314 = vmatmul.mubr.f32.gmra.mxu0 %v227
    %v315 = vpop.f32.mrf.mxu0
    %v316 = vadd.f32 %v248, %v315
    %v317 = vpop.f32.mrf.mxu0
    %318 = vdwg.mxu0
    %v319 = vmul.f32 %v316, 0.1
    %v320 = vmax.f32 %v316, %v319
    %v321 = vld [vmem:[#allocation5 + $0x108] sm:$0xff]
    %v322 = vld [vmem:[#allocation5 + $0x110] sm:$0xff]
    %v323 = vld [vmem:[#allocation5 + $0x118] sm:$0xff]
    %v324 = vld [vmem:[#allocation5 + $0x120] sm:$0xff]
    %v325 = vld [vmem:[#allocation5 + $0x128] sm:$0xff]
    %v326 = vld [vmem:[#allocation5 + $0x130] sm:$0xff]
    %v327 = vld [vmem:[#allocation5 + $0x138] sm:$0xff]
    %v328 = vld [vmem:[#allocation5 + $0x140] sm:$0xff]
    %v329 = vld [vmem:[#allocation5 + $0x148] sm:$0xff]
    %v330 = vld [vmem:[#allocation5 + $0x150] sm:$0xff]
    %v331 = vld [vmem:[#allocation5 + $0x158] sm:$0xff]
    %v332 = vld [vmem:[#allocation5 + $0x160] sm:$0xff]
    %v333 = vld [vmem:[#allocation5 + $0x168] sm:$0xff]
    %v334 = vld [vmem:[#allocation5 + $0x170] sm:$0xff]
    %v335 = vld [vmem:[#allocation5 + $0x178] sm:$0xff]
    %v336 = vld [vmem:[#allocation5 + $0x180] sm:$0xff]
    %v337 = vld [vmem:[#allocation7 + $0x3] sm:$0x1]
    %v338 = vlaneseq
    %v339 = vshrl.u32 %v338, 7
    %v340 = vsub.s32 0, %v339
    %v341 = vrot.slane %v337, %v340
    %342 = vmatprep.subr.mxu0 0.0
    %343 = vmatpush1.msra.mxu0 %v336
    %344 = vmatprep.subr.mxu0 0.0
    %345 = vmatpush1.msra.mxu0 %v335
    %346 = vmatprep.subr.mxu0 0.0
    %347 = vmatpush1.msra.mxu0 %v334
    %348 = vmatprep.subr.mxu0 0.0
    %349 = vmatpush1.msra.mxu0 %v333
    %350 = vmatprep.subr.mxu0 0.0
    %351 = vmatpush1.msra.mxu0 %v332
    %352 = vmatprep.subr.mxu0 0.0
    %353 = vmatpush1.msra.mxu0 %v331
    %354 = vmatprep.subr.mxu0 0.0
    %355 = vmatpush1.msra.mxu0 %v330
    %356 = vmatprep.subr.mxu0 0.0
    %357 = vmatpush1.msra.mxu0 %v329
    %358 = vmatprep.subr.mxu0 0.0
    %359 = vmatpush1.msra.mxu0 %v328
    %360 = vmatprep.subr.mxu0 0.0
    %361 = vmatpush1.msra.mxu0 %v327
    %362 = vmatprep.subr.mxu0 0.0
    %363 = vmatpush1.msra.mxu0 %v326
    %364 = vmatprep.subr.mxu0 0.0
    %365 = vmatpush1.msra.mxu0 %v325
    %366 = vmatprep.subr.mxu0 0.0
    %367 = vmatpush1.msra.mxu0 %v324
    %368 = vmatprep.subr.mxu0 0.0
    %369 = vmatpush1.msra.mxu0 %v323
    %370 = vmatprep.subr.mxu0 0.0
    %371 = vmatpush1.msra.mxu0 %v322
    %372 = vmatprep.subr.mxu0 0.0
    %373 = vmatpush1.msra.mxu0 %v321
    %374 = vmatprep.subr.mxu0 0.0
    %375 = vmatpush2.msra.mxu0 0.0
    %376 = vmatprep.subr.mxu0 0.0
    %377 = vmatpush2.msra.mxu0 0.0
    %378 = vmatprep.subr.mxu0 0.0
    %379 = vmatpush2.msra.mxu0 0.0
    %380 = vmatprep.subr.mxu0 0.0
    %381 = vmatpush2.msra.mxu0 0.0
    %382 = vmatprep.subr.mxu0 0.0
    %383 = vmatpush2.msra.mxu0 0.0
    %384 = vmatprep.subr.mxu0 0.0
    %385 = vmatpush2.msra.mxu0 0.0
    %386 = vmatprep.subr.mxu0 0.0
    %387 = vmatpush2.msra.mxu0 0.0
    %388 = vmatprep.subr.mxu0 0.0
    %389 = vmatpush2.msra.mxu0 0.0
    %390 = vmatprep.subr.mxu0 0.0
    %391 = vmatpush2.msra.mxu0 0.0
    %392 = vmatprep.subr.mxu0 0.0
    %393 = vmatpush2.msra.mxu0 0.0
    %394 = vmatprep.subr.mxu0 0.0
    %395 = vmatpush2.msra.mxu0 0.0
    %396 = vmatprep.subr.mxu0 0.0
    %397 = vmatpush2.msra.mxu0 0.0
    %398 = vmatprep.subr.mxu0 0.0
    %399 = vmatpush2.msra.mxu0 0.0
    %400 = vmatprep.subr.mxu0 0.0
    %401 = vmatpush2.msra.mxu0 0.0
    %402 = vmatprep.subr.mxu0 0.0
    %403 = vmatpush2.msra.mxu0 0.0
    %404 = vmatprep.subr.mxu0 0.0
    %405 = vmatpush2.msra.mxu0 0.0
    %406 = vmatprep.mubr.f32.mxu0 0.0
    %407 = vmatmul.mubr.f32.gmra.mxu0 %v320
    %v408 = vpop.f32.mrf.mxu0
    %v409 = vadd.f32 %v341, %v408
    %v410 = vpop.f32.mrf.mxu0
    %411 = vdwg.mxu0
    %v412 = vmul.f32 %v409, 0.1
    %v413 = vmax.f32 %v409, %v412
    %414 = vst [vmem:[#allocation8] sm:$0xff] %v413
    // Predicated region
    $region26: #{tpu_custom_call.1} parent=1 // pred_check
      _
    $region27: #{tpu_custom_call.1} parent=1 // pred_check_branch
      %416 = sbr.rel (0) target = $region29
    $region28: #{tpu_custom_call.1} parent=1 // pred_region
      %s418 = ssub.s32 128, 128
      %419 = vsyncadd [#allocation4], %s418
      %s421 = sshll.u32 [#allocation8], 4
      %s422 = int_to_ptr.vmem [resolvable:$true] %s421
      %424 = dma.vmem_to_hbm [thread:$0]  %s422, 128, %s3, [#allocation4]
    $region29: #{tpu_custom_call.1} parent=1 // pred_fallthru
      _
    // Predicated region
    $region30: #{tpu_custom_call.1} parent=1 // pred_check
      _
    $region31: #{tpu_custom_call.1} parent=1 // pred_check_branch
      %426 = sbr.rel (0) target = $region33
    $region32: #{tpu_custom_call.1} parent=1 // pred_region
      %427 = dma.done [#allocation4], 128
    $region33: #{tpu_custom_call.1} parent=1 // pred_fallthru
      _
    %428 = vsyncpa [#allocation3], 1
    %429 = vsyncpa [#allocation6], 1
    %430 = vsyncpa [#allocation4], 1

</llo_original>
